<compile_context>
chip_gen: v7x
topology: tpu7x:2x2x1
jax: 0.10.0
libtpu: 0.0.40
codegen_flags: <defaults>
</compile_context>

<pallas_src>
import functools

import jax
import jax.numpy as jnp
from jax import lax
from jax.experimental import pallas as pl
from jax.experimental.pallas import tpu as pltpu


def _atloss_kernel(logits_ref, labels_ref, out_ref, *, n_true):
    logits = logits_ref[...].astype(jnp.float32)   # (TM, C)
    labels = labels_ref[...].astype(jnp.float32)   # (TM, C)
    tm, c = logits.shape

    col = lax.broadcasted_iota(jnp.int32, (tm, c), 1)
    is_th = col == 0
    # `labels[:, 0] = 0` from the reference: positives exclude the TH class.
    pos = (labels > 0) & jnp.logical_not(is_th)
    labels_z = jnp.where(pos, labels, 0.0)

    neg_big = jnp.float32(-1e30)

    # loss1: rank positive classes above TH (softmax over positives + TH).
    logit1 = jnp.where(pos | is_th, logits, neg_big)
    m1 = jnp.max(logit1, axis=-1, keepdims=True)
    z1 = logit1 - m1
    lse1 = jnp.log(jnp.sum(jnp.exp(z1), axis=-1, keepdims=True))
    loss1 = -jnp.sum((z1 - lse1) * labels_z, axis=-1, keepdims=True)   # (TM, 1)

    # loss2: rank TH above negatives (softmax over negatives + TH).
    # Only the TH lane of log_softmax(logit2) is needed:
    #   loss2 = -(log_softmax(logit2)[:, 0]) = m2 + lse2 - logits[:, 0]
    logit2 = jnp.where(pos, neg_big, logits)
    m2 = jnp.max(logit2, axis=-1, keepdims=True)
    lse2 = jnp.log(jnp.sum(jnp.exp(logit2 - m2), axis=-1, keepdims=True))
    loss2 = m2 + lse2 - logits[:, 0:1]                                 # (TM, 1)

    # Zero out padded rows of the last tile (global row >= true batch size).
    row = pl.program_id(0) * tm + lax.broadcasted_iota(jnp.int32, (tm, 1), 0)
    loss = jnp.where(row < n_true, loss1 + loss2, 0.0)

    # Lane-dense, unmasked store of the tile's partial sum (splat into the
    # full (8, 128) block); the wrapper reads element [0, 0].
    partial = jnp.sum(loss).reshape(1, 1, 1)
    out_ref[...] = jnp.broadcast_to(partial, out_ref.shape).astype(jnp.float32)


def at_loss(logits, labels, *, block_rows=512):
    """Pallas implementation of ATLoss.forward. Returns a scalar float32."""
    n, c = logits.shape
    # NOTE: labels could be shipped as int8/bool (4x less HBM traffic) when the
    # caller guarantees multi-hot 0/1 labels; kept float32 for full generality.
    logits = logits.astype(jnp.float32)
    labels = labels.astype(jnp.float32)

    # Tile rows: big tiles for large N, a single 8-aligned tile for small N.
    tm = block_rows if n >= block_rows else ((n + 7) // 8) * 8
    num_tiles = pl.cdiv(n, tm)
    n_pad = num_tiles * tm
    if n_pad != n:
        logits = jnp.pad(logits, ((0, n_pad - n), (0, 0)))
        labels = jnp.pad(labels, ((0, n_pad - n), (0, 0)))

    partials = pl.pallas_call(
        functools.partial(_atloss_kernel, n_true=n),
        out_shape=jax.ShapeDtypeStruct((num_tiles, 8, 128), jnp.float32),
        grid=(num_tiles,),
        in_specs=[
            pl.BlockSpec((tm, c), lambda i: (i, 0)),
            pl.BlockSpec((tm, c), lambda i: (i, 0)),
        ],
        out_specs=pl.BlockSpec((1, 8, 128), lambda i: (i, 0, 0)),
        compiler_params=pltpu.CompilerParams(
            dimension_semantics=("parallel",),
            vmem_limit_bytes=32 * 1024 * 1024,
        ),
    )(logits, labels)

    # Final mean over the *true* batch size, reduced in the wrapper.
    return partials[:, 0, 0].sum() / jnp.float32(n)


def _at_loss_ref(logits, labels):
    """Pure-JAX reference mirroring the PyTorch module exactly."""
    labels = labels.astype(jnp.float32)
    th_label = jnp.zeros_like(labels).at[:, 0].set(1.0)
    labels = labels.at[:, 0].set(0.0)
    p_mask = labels + th_label
    n_mask = 1.0 - labels
    logit1 = logits - (1.0 - p_mask) * 1e30
    loss1 = -(jax.nn.log_softmax(logit1, axis=-1) * labels).sum(1)
    logit2 = logits - (1.0 - n_mask) * 1e30
    loss2 = -(jax.nn.log_softmax(logit2, axis=-1) * th_label).sum(1)
    return (loss1 + loss2).mean()


if __name__ == "__main__":
    key = jax.random.PRNGKey(0)
    k1, k2, k3, k4 = jax.random.split(key, 4)

    # Small demo: batch of 8 entity pairs, 32 relation classes (class 0 = TH).
    N, C = 8, 32
    logits = jax.random.normal(k1, (N, C), dtype=jnp.float32)
    labels = (jax.random.uniform(k2, (N, C)) < 0.2).astype(jnp.float32)

    loss = at_loss(logits, labels)
    jax.block_until_ready(loss)
    ref = _at_loss_ref(logits, labels)
    assert jnp.allclose(loss, ref, rtol=1e-5, atol=1e-5), (loss, ref)

    # Exercise the tiled path: multiple grid steps plus a padded last tile.
    N2, C2 = 20, 32
    logits2 = jax.random.normal(k3, (N2, C2), dtype=jnp.float32)
    labels2 = (jax.random.uniform(k4, (N2, C2)) < 0.2).astype(jnp.float32)
    loss_t = at_loss(logits2, labels2, block_rows=8)
    jax.block_until_ready(loss_t)
    ref_t = _at_loss_ref(logits2, labels2)
    assert jnp.allclose(loss_t, ref_t, rtol=1e-5, atol=1e-5), (loss_t, ref_t)

    print("KERNEL_OK")
</pallas_src>

<mosaic_0001>
module attributes {stable_mosaic.version = 11 : i64} {
  func.func @_atloss_kernel(%arg0: i32, %arg1: memref<8x32xf32, #tpu.memory_space<vmem>>, %arg2: memref<8x32xf32, #tpu.memory_space<vmem>>, %arg3: memref<1x8x128xf32, #tpu.memory_space<vmem>>) attributes {dimension_semantics = [#tpu.dimension_semantics<parallel>], iteration_bounds = array<i64: 1>, scalar_prefetch = 0 : i64, scratch_operands = 0 : i64, tpu.core_type = #tpu.core_type<tc>, window_params = [{transform_indices = @transform_0, window_bounds = array<i64: 8, 32>}, {transform_indices = @transform_1, window_bounds = array<i64: 8, 32>}, {transform_indices = @transform_2, window_bounds = array<i64: 1, 8, 128>}]} {
    %c0 = arith.constant 0 : index
    %c0_0 = arith.constant 0 : index
    %0 = vector.load %arg1[%c0, %c0_0] : memref<8x32xf32, #tpu.memory_space<vmem>>, vector<8x32xf32>
    %c0_1 = arith.constant 0 : index
    %c0_2 = arith.constant 0 : index
    %1 = vector.load %arg2[%c0_1, %c0_2] : memref<8x32xf32, #tpu.memory_space<vmem>>, vector<8x32xf32>
    %2 = tpu.iota {dimensions = array<i32: 1>} : vector<8x32xi32>
    %c0_i32 = arith.constant 0 : i32
    %3 = vector.broadcast %c0_i32 : i32 to vector<8x32xi32>
    %4 = arith.cmpi eq, %2, %3 : vector<8x32xi32>
    %cst = arith.constant 0.000000e+00 : f32
    %5 = vector.broadcast %cst : f32 to vector<8x32xf32>
    %6 = arith.cmpf ogt, %1, %5 : vector<8x32xf32>
    %cst_3 = arith.constant dense<true> : vector<8x32xi1>
    %7 = arith.xori %4, %cst_3 : vector<8x32xi1>
    %8 = arith.andi %6, %7 : vector<8x32xi1>
    %cst_4 = arith.constant 0.000000e+00 : f32
    %9 = vector.broadcast %cst_4 : f32 to vector<8x32xf32>
    %10 = arith.select %8, %1, %9 : vector<8x32xi1>, vector<8x32xf32>
    %11 = arith.ori %8, %4 : vector<8x32xi1>
    %cst_5 = arith.constant -1.000000e+30 : f32
    %12 = vector.broadcast %cst_5 : f32 to vector<8x32xf32>
    %13 = arith.select %11, %0, %12 : vector<8x32xi1>, vector<8x32xf32>
    %cst_6 = arith.constant dense<0xFF800000> : vector<8xf32>
    %14 = vector.multi_reduction <maximumf>, %13, %cst_6 [1] : vector<8x32xf32> to vector<8xf32>
    %15 = vector.shape_cast %14 : vector<8xf32> to vector<8x1xf32>
    %16 = vector.broadcast %15 : vector<8x1xf32> to vector<8x32xf32>
    %17 = arith.subf %13, %16 : vector<8x32xf32>
    %18 = math.exp %17 : vector<8x32xf32>
    %cst_7 = arith.constant dense<0.000000e+00> : vector<8xf32>
    %19 = vector.multi_reduction <add>, %18, %cst_7 [1] : vector<8x32xf32> to vector<8xf32>
    %20 = vector.shape_cast %19 : vector<8xf32> to vector<8x1xf32>
    %21 = math.log %20 : vector<8x1xf32>
    %22 = vector.broadcast %21 : vector<8x1xf32> to vector<8x32xf32>
    %23 = arith.subf %17, %22 : vector<8x32xf32>
    %24 = arith.mulf %23, %10 : vector<8x32xf32>
    %cst_8 = arith.constant dense<0.000000e+00> : vector<8xf32>
    %25 = vector.multi_reduction <add>, %24, %cst_8 [1] : vector<8x32xf32> to vector<8xf32>
    %26 = vector.shape_cast %25 : vector<8xf32> to vector<8x1xf32>
    %cst_9 = arith.constant 0.000000e+00 : f32
    %27 = vector.broadcast %cst_9 : f32 to vector<8x1xf32>
    %28 = arith.subf %27, %26 : vector<8x1xf32>
    %cst_10 = arith.constant -1.000000e+30 : f32
    %29 = vector.broadcast %cst_10 : f32 to vector<8x32xf32>
    %30 = arith.select %8, %29, %0 : vector<8x32xi1>, vector<8x32xf32>
    %cst_11 = arith.constant dense<0xFF800000> : vector<8xf32>
    %31 = vector.multi_reduction <maximumf>, %30, %cst_11 [1] : vector<8x32xf32> to vector<8xf32>
    %32 = vector.shape_cast %31 : vector<8xf32> to vector<8x1xf32>
    %33 = vector.broadcast %32 : vector<8x1xf32> to vector<8x32xf32>
    %34 = arith.subf %30, %33 : vector<8x32xf32>
    %35 = math.exp %34 : vector<8x32xf32>
    %cst_12 = arith.constant dense<0.000000e+00> : vector<8xf32>
    %36 = vector.multi_reduction <add>, %35, %cst_12 [1] : vector<8x32xf32> to vector<8xf32>
    %37 = vector.shape_cast %36 : vector<8xf32> to vector<8x1xf32>
    %38 = math.log %37 : vector<8x1xf32>
    %39 = arith.addf %32, %38 : vector<8x1xf32>
    %40 = vector.extract_strided_slice %0 {offsets = [0, 0], sizes = [8, 1], strides = [1, 1]} : vector<8x32xf32> to vector<8x1xf32>
    %41 = arith.subf %39, %40 : vector<8x1xf32>
    %c8_i32 = arith.constant 8 : i32
    %42 = arith.muli %arg0, %c8_i32 : i32
    %43 = tpu.iota {dimensions = array<i32: 0>} : vector<8x1xi32>
    %44 = vector.broadcast %42 : i32 to vector<8x1xi32>
    %45 = arith.addi %44, %43 : vector<8x1xi32>
    %c8_i32_13 = arith.constant 8 : i32
    %46 = vector.broadcast %c8_i32_13 : i32 to vector<8x1xi32>
    %47 = arith.cmpi slt, %45, %46 : vector<8x1xi32>
    %48 = arith.addf %28, %41 : vector<8x1xf32>
    %cst_14 = arith.constant 0.000000e+00 : f32
    %49 = vector.broadcast %cst_14 : f32 to vector<8x1xf32>
    %50 = arith.select %47, %48, %49 : vector<8x1xi1>, vector<8x1xf32>
    %51 = vector.shape_cast %50 : vector<8x1xf32> to vector<1x8x1xf32>
    %cst_15 = arith.constant dense<0.000000e+00> : vector<1xf32>
    %52 = vector.multi_reduction <add>, %51, %cst_15 [1, 2] : vector<1x8x1xf32> to vector<1xf32>
    %53 = vector.shape_cast %52 : vector<1xf32> to vector<1x1x1xf32>
    %54 = vector.extract %53[0, 0, 0] : f32 from vector<1x1x1xf32>
    %55 = vector.broadcast %54 : f32 to vector<1x1x1xf32>
    %56 = vector.shape_cast %55 : vector<1x1x1xf32> to vector<1x1x1xf32>
    %57 = vector.broadcast %56 : vector<1x1x1xf32> to vector<1x8x128xf32>
    %c0_16 = arith.constant 0 : index
    %c0_17 = arith.constant 0 : index
    %c0_18 = arith.constant 0 : index
    %58 = vector.load %arg3[%c0_16, %c0_17, %c0_18] : memref<1x8x128xf32, #tpu.memory_space<vmem>>, vector<1x8x128xf32>
    tpu.vector_store %arg3[%c0_16, %c0_17, %c0_18], %57 {strides = array<i32>} : memref<1x8x128xf32, #tpu.memory_space<vmem>>, vector<1x8x128xf32>,
    return
  }
  func.func @transform_0(%arg0: i32) -> (i32, i32) {
    %c0_i32 = arith.constant 0 : i32
    %c0_i32_0 = arith.constant 0 : i32
    return %arg0, %c0_i32 : i32, i32
  }
  func.func @transform_1(%arg0: i32) -> (i32, i32) {
    %c0_i32 = arith.constant 0 : i32
    %c0_i32_0 = arith.constant 0 : i32
    return %arg0, %c0_i32 : i32, i32
  }
  func.func @transform_2(%arg0: i32) -> (i32, i32, i32) {
    %c0_i32 = arith.constant 0 : i32
    %c0_i32_0 = arith.constant 0 : i32
    %c0_i32_1 = arith.constant 0 : i32
    return %arg0, %c0_i32, %c0_i32_0 : i32, i32, i32
  }
}

</mosaic_0001>

<llo_original>
// kernel: tpu_custom_call.1
$region0: #{tpu_custom_call.1}
  #allocation0 [shape = 'u32[]', space=smem, size = 0x4, offset = 0x4, fixed_abs, tag = 'smem constant byte address 0x4 - core index']
  #allocation1 [shape = 'u32[144,128]{1,0:T(1,128)}', space=vmem, size = 0x12000, scoped, tag = 'internal scratch']
  %s0 = inlined_call_operand.hbm [shape: f32[8,32], index: 0, kind: input, shape index: {}]
  %s1 = inlined_call_operand.hbm [shape: f32[8,32], index: 1, kind: input, shape index: {}]
  %s2 = inlined_call_operand.hbm [shape: f32[1,8,128], index: 2, kind: output, shape index: {}]
  %s3 = sld [smem:[#allocation0]]
  $region26: #{tpu_custom_call.1} parent=0
    _
  %s5 = ssub.s32 1, %s3
  %s6 = scalar_select 0, %s5, %s3
  $region1: #{tpu_custom_call.1} parent=0
    #allocation2 [shape = 'u8[4096]{0}', space=vmem, size = 0x1000, scoped, tag = 'input window, operand 0, single buffered']
    #allocation3 [shape = 's32[1]{0}', space=sflag, size = 0x4, scoped, tag = 'scoped memory for tpu_custom_call.1']
    #allocation4 [shape = 's32[1]{0}', space=sflag, size = 0x4, scoped, tag = 'scoped memory for tpu_custom_call.1']
    #allocation5 [shape = 'u8[4096]{0}', space=vmem, size = 0x1000, scoped, tag = 'input window, operand 1, single buffered']
    #allocation6 [shape = 's32[1]{0}', space=sflag, size = 0x4, scoped, tag = 'scoped memory for tpu_custom_call.1']
    #allocation7 [shape = 'u8[4096]{0}', space=vmem, size = 0x1000, scoped, tag = 'output window, operand 0, single buffered']
    %7 = vsyncpa [#allocation3], 0
    %8 = vsyncpa [#allocation6], 0
    %9 = vsyncpa [#allocation4], 0
    // Predicated region
    $region2: #{tpu_custom_call.1} parent=1 // pred_check
      _
    $region3: #{tpu_custom_call.1} parent=1 // pred_check_branch
      %11 = sbr.rel (0) target = $region5
    $region4: #{tpu_custom_call.1} parent=1 // pred_region
      %s13 = ssub.s32 128, 128
      %14 = vsyncadd [#allocation3], %s13
      %s16 = sshll.u32 [#allocation2], 4
      %s17 = int_to_ptr.vmem [resolvable:$true] %s16
      %19 = dma.hbm_to_vmem [thread:$0]  %s0, 128, %s17, [#allocation3]
    $region5: #{tpu_custom_call.1} parent=1 // pred_fallthru
      _
    // Predicated region
    $region6: #{tpu_custom_call.1} parent=1 // pred_check
      _
    $region7: #{tpu_custom_call.1} parent=1 // pred_check_branch
      %21 = sbr.rel (0) target = $region9
    $region8: #{tpu_custom_call.1} parent=1 // pred_region
      %s23 = ssub.s32 128, 128
      %24 = vsyncadd [#allocation6], %s23
      %s26 = sshll.u32 [#allocation5], 4
      %s27 = int_to_ptr.vmem [resolvable:$true] %s26
      %29 = dma.hbm_to_vmem [thread:$0]  %s1, 128, %s27, [#allocation6]
    $region9: #{tpu_custom_call.1} parent=1 // pred_fallthru
      _
    // Predicated region
    $region10: #{tpu_custom_call.1} parent=1 // pred_check
      _
    $region11: #{tpu_custom_call.1} parent=1 // pred_check_branch
      %31 = sbr.rel (0) target = $region13
    $region12: #{tpu_custom_call.1} parent=1 // pred_region
      %32 = dma.done [#allocation3], 128
    $region13: #{tpu_custom_call.1} parent=1 // pred_fallthru
      _
    // Predicated region
    $region14: #{tpu_custom_call.1} parent=1 // pred_check
      _
    $region15: #{tpu_custom_call.1} parent=1 // pred_check_branch
      %34 = sbr.rel (0) target = $region17
    $region16: #{tpu_custom_call.1} parent=1 // pred_region
      %35 = dma.done [#allocation6], 128
    $region17: #{tpu_custom_call.1} parent=1 // pred_fallthru
      _
    %v36 = vld [vmem:[#allocation2] sm:$0xff]
    %v37 = vld [vmem:[#allocation5] sm:$0xff]
    %v38 = vlaneseq
    %v39 = vand.u32 %v38, 127
    %vm40 = vcmp.eq.s32.totalorder %v39, 0
    %vm41 = vcmp.gt.f32.partialorder %v37, 0.0
    %vm42 = vmxor %vm40, 1
    %vm43 = vmand %vm41, %vm42
    %v44 = vsel %vm43, %v37, 0.0
    %vm45 = vmor %vm43, %vm40
    %v46 = vsel %vm45, %v36, -1e+30
    %vm47 = vcmask 261120
    %v48 = vsel %vm47, %v46, -inf
    %49 = vmax.xlane.f32.xlu0 %v48
    %v50 = vpop.xlane.xlu0 %49
    %v51 = vsub.f32 %v46, %v50
    %v52 = vmul.f32 %v51, 1.442695
    %v53 = vpow.pop %v52
    %v54 = vsel %vm47, %v53, 0.0
    %55 = vadd.xlane.f32.xlu0 %v54
    %v56 = vpop.xlane.xlu0 %55
    %v57 = vlog2.pop %v56
    %v58 = vmul.f32 %v57, 0.6931472
    %v59 = vsub.f32 %v51, %v58
    %v60 = vmul.f32 %v59, %v44
    %v61 = vsel %vm47, %v60, 0.0
    %62 = vadd.xlane.f32.xlu0 %v61
    %v63 = vpop.xlane.xlu0 %62
    %v64 = vsub.f32 0.0, %v63
    %v65 = vsel %vm43, -1e+30, %v36
    %v66 = vsel %vm47, %v65, -inf
    %67 = vmax.xlane.f32.xlu0 %v66
    %v68 = vpop.xlane.xlu0 %67
    %v69 = vsub.f32 %v65, %v68
    %v70 = vmul.f32 %v69, 1.442695
    %v71 = vpow.pop %v70
    %v72 = vsel %vm47, %v71, 0.0
    %73 = vadd.xlane.f32.xlu0 %v72
    %v74 = vpop.xlane.xlu0 %73
    %v75 = vlog2.pop %v74
    %v76 = vmul.f32 %v75, 0.6931472
    %v77 = vadd.f32 %v68, %v76
    %v78 = vsub.f32 %v77, %v36
    %s79 = smul.u32 0, 8
    %v80 = vlaneseq
    %v81 = vshrl.u32 %v80, 7
    %v82 = vstv %s79
    %v83 = vadd.s32 %v82, %v81
    %vm84 = vcmp.lt.s32.totalorder %v83, 8
    %v85 = vadd.f32 %v64, %v78
    %v86 = vsel %vm84, %v85, 0.0
    %vm87 = vcmask 7168
    %v88 = vsel %vm87, %v86, 0.0
    %89 = vadd.xlane.f32.xlu0 %v88
    %v90 = vpop.xlane.xlu0 %89
    %v91 = vrot.slane %v90, 4
    %v92 = vadd.f32 %v90, %v91
    %v93 = vrot.slane %v92, 2
    %v94 = vadd.f32 %v92, %v93
    %v95 = vrot.slane %v94, 1
    %v96 = vadd.f32 %v94, %v95
    %s97 = vtos %v96
    %v98 = vstv %s97
    %99 = vst [vmem:[#allocation7] sm:$0xff] %v98
    // Predicated region
    $region18: #{tpu_custom_call.1} parent=1 // pred_check
      _
    $region19: #{tpu_custom_call.1} parent=1 // pred_check_branch
      %101 = sbr.rel (0) target = $region21
    $region20: #{tpu_custom_call.1} parent=1 // pred_region
      %s103 = ssub.s32 128, 128
      %104 = vsyncadd [#allocation4], %s103
      %s106 = sshll.u32 [#allocation7], 4
      %s107 = int_to_ptr.vmem [resolvable:$true] %s106
      %109 = dma.vmem_to_hbm [thread:$0]  %s107, 128, %s2, [#allocation4]
    $region21: #{tpu_custom_call.1} parent=1 // pred_fallthru
      _
    // Predicated region
    $region22: #{tpu_custom_call.1} parent=1 // pred_check
      _
    $region23: #{tpu_custom_call.1} parent=1 // pred_check_branch
      %111 = sbr.rel (0) target = $region25
    $region24: #{tpu_custom_call.1} parent=1 // pred_region
      %112 = dma.done [#allocation4], 128
    $region25: #{tpu_custom_call.1} parent=1 // pred_fallthru
      _
    %113 = vsyncpa [#allocation3], 1
    %114 = vsyncpa [#allocation6], 1
    %115 = vsyncpa [#allocation4], 1

</llo_original>
